<compile_context>
chip_gen: v7x
topology: tpu7x:2x2x1
jax: 0.10.0
libtpu: 0.0.40
codegen_flags: <defaults>
</compile_context>

<pallas_src>
import functools

import jax
import jax.numpy as jnp
from jax.experimental import pallas as pl
from jax.experimental.pallas import tpu as pltpu


def _vmem_spec():
    return pl.BlockSpec(memory_space=pltpu.MemorySpace.VMEM)


# ---------------------------------------------------------------------------
# Fused Pallas kernel: all SAGE layers + log_softmax + NLL mean reduction
# ---------------------------------------------------------------------------
def fused_sage_nll_kernel(adj_ref, x_ref, *rest, num_layers):
    # rest = (wl_0, wr_0, b_0, ..., wl_{L-1}, wr_{L-1}, b_{L-1}, y_ref, loss_ref)
    wb_refs = rest[: 3 * num_layers]
    y_ref = rest[3 * num_layers]
    loss_ref = rest[3 * num_layers + 1]

    adj = adj_ref[...]            # (N, N) bf16, resident across all layers
    h = x_ref[...]                # (N, D) bf16

    logits = None
    for li in range(num_layers):
        wl = wb_refs[3 * li][...]          # (din, dout) bf16
        wr = wb_refs[3 * li + 1][...]      # (din, dout) bf16
        b = wb_refs[3 * li + 2][...]       # (1, dout)  f32

        # mean aggregation of neighbor features (dense form of scatter-mean)
        agg = jnp.dot(adj, h, preferred_element_type=jnp.float32)
        agg = agg.astype(jnp.bfloat16)

        z = (jnp.dot(agg, wl, preferred_element_type=jnp.float32)
             + jnp.dot(h, wr, preferred_element_type=jnp.float32)
             + b)

        if li != num_layers - 1:
            # TODO(synk): dropout between layers omitted (dropout=0.0 here)
            h = jnp.maximum(z, 0.0).astype(jnp.bfloat16)
        else:
            logits = z                    # (N, C) f32, never stored to HBM

    # F.log_softmax(pred, dim=1) followed by NLLLoss(mean), no one-hot
    m = jnp.max(logits, axis=1, keepdims=True)
    shifted = logits - m
    lse = jnp.log(jnp.sum(jnp.exp(shifted), axis=1, keepdims=True))
    logp = shifted - lse                                   # (N, C)

    labels = y_ref[...]                                    # (N, 1) int32
    col = jax.lax.broadcasted_iota(jnp.int32, logp.shape, 1)
    picked = jnp.where(col == labels, logp, 0.0)           # target log-probs

    inv_n = 1.0 / logp.shape[0]
    row_sum = jnp.sum(picked, axis=1, keepdims=True)       # (N, 1)
    total = jnp.sum(row_sum, axis=0, keepdims=True)        # (1, 1)
    loss_ref[...] = -total * inv_n                         # (1, 1) f32 VMEM


def fused_base_loss(adj_bf, x_bf, wls, wrs, biases, y_col):
    num_layers = len(wls)
    kernel = functools.partial(fused_sage_nll_kernel, num_layers=num_layers)

    args = [adj_bf, x_bf]
    for wl, wr, b in zip(wls, wrs, biases):
        args += [wl, wr, b]
    args.append(y_col)

    # small problem: all arrays fit in VMEM -> full-array blocks, no grid
    out = pl.pallas_call(
        kernel,
        out_shape=jax.ShapeDtypeStruct((1, 1), jnp.float32),
        in_specs=[_vmem_spec()] * len(args),
        out_specs=_vmem_spec(),
    )(*args)
    return out[0, 0]


# ---------------------------------------------------------------------------
# Glue: parameter init, dense aggregation matrix, Base.forward
# ---------------------------------------------------------------------------
def init_sage_params(key, in_dim, hidden_dim, out_dim, num_layers):
    dims = [in_dim] + [hidden_dim] * (num_layers - 1) + [out_dim]
    params = []
    for i in range(num_layers):
        key, k1, k2 = jax.random.split(key, 3)
        din, dout = dims[i], dims[i + 1]
        scale = 1.0 / jnp.sqrt(jnp.float32(din))
        wl = jax.random.uniform(k1, (din, dout), jnp.float32, -scale, scale)
        wr = jax.random.uniform(k2, (din, dout), jnp.float32, -scale, scale)
        b = jnp.zeros((1, dout), jnp.float32)
        params.append((wl, wr, b))
    return params


def build_mean_adj(edge_index, n):
    src, dst = edge_index[0], edge_index[1]
    adj = jnp.zeros((n, n), jnp.float32).at[dst, src].add(1.0)
    deg = jnp.maximum(adj.sum(axis=1, keepdims=True), 1.0)
    return adj / deg


def base_forward(params, x, edge_index, y, perturbation=None):
    """Base.forward: loss = NLLLoss(log_softmax(SAGE(x + pert, edge_index)), y.squeeze(1))."""
    n, _ = x.shape
    if perturbation is not None:
        x = x + perturbation
    # bf16 MXU operands (halves HBM bytes of the N^2 adjacency); f32 accumulation in-kernel
    adj_bf = build_mean_adj(edge_index, n).astype(jnp.bfloat16)
    x_bf = x.astype(jnp.bfloat16)
    wls = [wl.astype(jnp.bfloat16) for (wl, _, _) in params]
    wrs = [wr.astype(jnp.bfloat16) for (_, wr, _) in params]
    biases = [b for (_, _, b) in params]
    y_col = y.reshape(n, 1).astype(jnp.int32)
    return fused_base_loss(adj_bf, x_bf, wls, wrs, biases, y_col)


def base_forward_ref(params, x, edge_index, y, perturbation=None):
    """Pure-JAX f32 reference for correctness checking."""
    if perturbation is not None:
        x = x + perturbation
    adj = build_mean_adj(edge_index, x.shape[0])
    h = x
    for li, (wl, wr, b) in enumerate(params):
        h = adj @ h @ wl + h @ wr + b
        if li != len(params) - 1:
            h = jnp.maximum(h, 0.0)
    logp = jax.nn.log_softmax(h, axis=1)
    labels = y.squeeze(1)
    return -jnp.mean(logp[jnp.arange(h.shape[0]), labels])


if __name__ == "__main__":
    # small shapes: n nodes, d features, hidden channels, c classes, 2 layers
    N, D, HIDDEN, C, NUM_LAYERS, E = 16, 32, 32, 4, 2, 48

    key = jax.random.PRNGKey(0)
    k_par, k_x, k_src, k_dst, k_y = jax.random.split(key, 5)

    params = init_sage_params(k_par, D, HIDDEN, C, NUM_LAYERS)
    x = jax.random.normal(k_x, (N, D), jnp.float32)              # data.graph['node_feat']
    edge_index = jnp.stack([
        jax.random.randint(k_src, (E,), 0, N),                   # data.graph['edge_index']
        jax.random.randint(k_dst, (E,), 0, N),
    ]).astype(jnp.int32)
    y = jax.random.randint(k_y, (N, 1), 0, C).astype(jnp.int32)  # data.label

    loss = jax.jit(base_forward)(params, x, edge_index, y)
    loss = jax.block_until_ready(loss)

    # f32 reference; kernel feeds the MXU bf16 (f32 accumulation), so compare
    # with bf16-appropriate tolerances.
    loss_ref = base_forward_ref(params, x, edge_index, y, perturbation=None)
    assert jnp.allclose(loss, loss_ref, rtol=3e-2, atol=3e-2), (loss, loss_ref)

    print("KERNEL_OK")
</pallas_src>

<mosaic_0001>
module attributes {stable_mosaic.version = 11 : i64} {
  func.func private @main(%arg0: i32) attributes {dimension_semantics = [#tpu.dimension_semantics<core_parallel>], iteration_bounds = array<i64: 2>, tpu.core_type = #tpu.core_type<sc_scalar_subcore>, window_params = []} {
    return
  }
}

module attributes {stable_mosaic.version = 11 : i64} {
  func.func private @main(%arg0: i32) attributes {dimension_semantics = [#tpu.dimension_semantics<core_parallel>], iteration_bounds = array<i64: 2>, tpu.core_type = #tpu.core_type<sc_scalar_subcore>, window_params = []} {
    return
  }
}

module attributes {stable_mosaic.version = 11 : i64} {
  func.func @fused_sage_nll_kernel(%arg0: memref<16x16xbf16, #tpu.memory_space<vmem>>, %arg1: memref<16x32xbf16, #tpu.memory_space<vmem>>, %arg2: memref<32x32xbf16, #tpu.memory_space<vmem>>, %arg3: memref<32x32xbf16, #tpu.memory_space<vmem>>, %arg4: memref<1x32xf32, #tpu.memory_space<vmem>>, %arg5: memref<32x4xbf16, #tpu.memory_space<vmem>>, %arg6: memref<32x4xbf16, #tpu.memory_space<vmem>>, %arg7: memref<1x4xf32, #tpu.memory_space<vmem>>, %arg8: memref<16x1xi32, #tpu.memory_space<vmem>>, %arg9: memref<1x1xf32, #tpu.memory_space<vmem>>) attributes {dimension_semantics = [], scalar_prefetch = 0 : i64, scratch_operands = 0 : i64, tpu.core_type = #tpu.core_type<tc>} {
    %c0 = arith.constant 0 : index
    %c0_0 = arith.constant 0 : index
    %0 = vector.load %arg0[%c0, %c0_0] : memref<16x16xbf16, #tpu.memory_space<vmem>>, vector<16x16xbf16>
    %c0_1 = arith.constant 0 : index
    %c0_2 = arith.constant 0 : index
    %1 = vector.load %arg1[%c0_1, %c0_2] : memref<16x32xbf16, #tpu.memory_space<vmem>>, vector<16x32xbf16>
    %c0_3 = arith.constant 0 : index
    %c0_4 = arith.constant 0 : index
    %2 = vector.load %arg2[%c0_3, %c0_4] : memref<32x32xbf16, #tpu.memory_space<vmem>>, vector<32x32xbf16>
    %c0_5 = arith.constant 0 : index
    %c0_6 = arith.constant 0 : index
    %3 = vector.load %arg3[%c0_5, %c0_6] : memref<32x32xbf16, #tpu.memory_space<vmem>>, vector<32x32xbf16>
    %c0_7 = arith.constant 0 : index
    %c0_8 = arith.constant 0 : index
    %4 = vector.load %arg4[%c0_7, %c0_8] : memref<1x32xf32, #tpu.memory_space<vmem>>, vector<1x32xf32>
    %cst = arith.constant dense<0.000000e+00> : vector<16x32xf32>
    %5 = tpu.matmul %0, %1, %cst {dimension_numbers = #tpu.dot_dimension_numbers<[1], [0], [0], [1], [0, 0, 1, 1], [], []>} : vector<16x16xbf16>, vector<16x32xbf16>, vector<16x32xf32> -> vector<16x32xf32>
    %6 = arith.truncf %5 : vector<16x32xf32> to vector<16x32xbf16>
    %cst_9 = arith.constant dense<0.000000e+00> : vector<16x32xf32>
    %7 = tpu.matmul %6, %2, %cst_9 {dimension_numbers = #tpu.dot_dimension_numbers<[1], [0], [0], [1], [0, 0, 1, 1], [], []>} : vector<16x32xbf16>, vector<32x32xbf16>, vector<16x32xf32> -> vector<16x32xf32>
    %cst_10 = arith.constant dense<0.000000e+00> : vector<16x32xf32>
    %8 = tpu.matmul %1, %3, %cst_10 {dimension_numbers = #tpu.dot_dimension_numbers<[1], [0], [0], [1], [0, 0, 1, 1], [], []>} : vector<16x32xbf16>, vector<32x32xbf16>, vector<16x32xf32> -> vector<16x32xf32>
    %9 = arith.addf %7, %8 : vector<16x32xf32>
    %10 = vector.broadcast %4 : vector<1x32xf32> to vector<16x32xf32>
    %11 = arith.addf %9, %10 : vector<16x32xf32>
    %cst_11 = arith.constant 0.000000e+00 : f32
    %12 = vector.broadcast %cst_11 : f32 to vector<16x32xf32>
    %13 = arith.maximumf %11, %12 : vector<16x32xf32>
    %14 = arith.truncf %13 : vector<16x32xf32> to vector<16x32xbf16>
    %c0_12 = arith.constant 0 : index
    %c0_13 = arith.constant 0 : index
    %15 = vector.load %arg5[%c0_12, %c0_13] : memref<32x4xbf16, #tpu.memory_space<vmem>>, vector<32x4xbf16>
    %c0_14 = arith.constant 0 : index
    %c0_15 = arith.constant 0 : index
    %16 = vector.load %arg6[%c0_14, %c0_15] : memref<32x4xbf16, #tpu.memory_space<vmem>>, vector<32x4xbf16>
    %c0_16 = arith.constant 0 : index
    %c0_17 = arith.constant 0 : index
    %17 = vector.load %arg7[%c0_16, %c0_17] : memref<1x4xf32, #tpu.memory_space<vmem>>, vector<1x4xf32>
    %cst_18 = arith.constant dense<0.000000e+00> : vector<16x32xf32>
    %18 = tpu.matmul %0, %14, %cst_18 {dimension_numbers = #tpu.dot_dimension_numbers<[1], [0], [0], [1], [0, 0, 1, 1], [], []>} : vector<16x16xbf16>, vector<16x32xbf16>, vector<16x32xf32> -> vector<16x32xf32>
    %19 = arith.truncf %18 : vector<16x32xf32> to vector<16x32xbf16>
    %cst_19 = arith.constant dense<0.000000e+00> : vector<16x4xf32>
    %20 = tpu.matmul %19, %15, %cst_19 {dimension_numbers = #tpu.dot_dimension_numbers<[1], [0], [0], [1], [0, 0, 1, 1], [], []>} : vector<16x32xbf16>, vector<32x4xbf16>, vector<16x4xf32> -> vector<16x4xf32>
    %cst_20 = arith.constant dense<0.000000e+00> : vector<16x4xf32>
    %21 = tpu.matmul %14, %16, %cst_20 {dimension_numbers = #tpu.dot_dimension_numbers<[1], [0], [0], [1], [0, 0, 1, 1], [], []>} : vector<16x32xbf16>, vector<32x4xbf16>, vector<16x4xf32> -> vector<16x4xf32>
    %22 = arith.addf %20, %21 : vector<16x4xf32>
    %23 = vector.broadcast %17 : vector<1x4xf32> to vector<16x4xf32>
    %24 = arith.addf %22, %23 : vector<16x4xf32>
    %cst_21 = arith.constant dense<0xFF800000> : vector<16xf32>
    %25 = vector.multi_reduction <maximumf>, %24, %cst_21 [1] : vector<16x4xf32> to vector<16xf32>
    %26 = vector.shape_cast %25 : vector<16xf32> to vector<16x1xf32>
    %27 = vector.broadcast %26 : vector<16x1xf32> to vector<16x4xf32>
    %28 = arith.subf %24, %27 : vector<16x4xf32>
    %29 = math.exp %28 : vector<16x4xf32>
    %cst_22 = arith.constant dense<0.000000e+00> : vector<16xf32>
    %30 = vector.multi_reduction <add>, %29, %cst_22 [1] : vector<16x4xf32> to vector<16xf32>
    %31 = vector.shape_cast %30 : vector<16xf32> to vector<16x1xf32>
    %32 = math.log %31 : vector<16x1xf32>
    %33 = vector.broadcast %32 : vector<16x1xf32> to vector<16x4xf32>
    %34 = arith.subf %28, %33 : vector<16x4xf32>
    %c0_23 = arith.constant 0 : index
    %c0_24 = arith.constant 0 : index
    %35 = vector.load %arg8[%c0_23, %c0_24] : memref<16x1xi32, #tpu.memory_space<vmem>>, vector<16x1xi32>
    %36 = tpu.iota {dimensions = array<i32: 1>} : vector<16x4xi32>
    %37 = vector.broadcast %35 : vector<16x1xi32> to vector<16x4xi32>
    %38 = arith.cmpi eq, %36, %37 : vector<16x4xi32>
    %cst_25 = arith.constant 0.000000e+00 : f32
    %39 = vector.broadcast %cst_25 : f32 to vector<16x4xf32>
    %40 = arith.select %38, %34, %39 : vector<16x4xi1>, vector<16x4xf32>
    %cst_26 = arith.constant dense<0.000000e+00> : vector<16xf32>
    %41 = vector.multi_reduction <add>, %40, %cst_26 [1] : vector<16x4xf32> to vector<16xf32>
    %42 = vector.shape_cast %41 : vector<16xf32> to vector<16x1xf32>
    %cst_27 = arith.constant dense<0.000000e+00> : vector<1xf32>
    %43 = vector.multi_reduction <add>, %42, %cst_27 [0] : vector<16x1xf32> to vector<1xf32>
    %44 = vector.shape_cast %43 : vector<1xf32> to vector<1x1xf32>
    %cst_28 = arith.constant 0.000000e+00 : f32
    %45 = vector.broadcast %cst_28 : f32 to vector<1x1xf32>
    %46 = arith.subf %45, %44 : vector<1x1xf32>
    %cst_29 = arith.constant 6.250000e-02 : f32
    %47 = vector.broadcast %cst_29 : f32 to vector<1x1xf32>
    %48 = arith.mulf %46, %47 : vector<1x1xf32>
    %c0_30 = arith.constant 0 : index
    %c0_31 = arith.constant 0 : index
    %49 = vector.load %arg9[%c0_30, %c0_31] : memref<1x1xf32, #tpu.memory_space<vmem>>, vector<1x1xf32>
    tpu.vector_store %arg9[%c0_30, %c0_31], %48 {strides = array<i32>} : memref<1x1xf32, #tpu.memory_space<vmem>>, vector<1x1xf32>,
    return
  }
}

</mosaic_0001>

<llo_original>
// kernel: base_forward.1
$region0: #{base_forward.1}
  #allocation0 [shape = 'u32[]', space=smem, size = 0x4, offset = 0x4, fixed_abs, tag = 'smem constant byte address 0x4 - core index']
  #allocation1 [shape = 'u32[144,128]{1,0:T(1,128)}', space=vmem, size = 0x12000, scoped, tag = 'internal scratch']
  %s0 = inlined_call_operand.vmem [shape: bf16[16,16], index: 0, kind: input, shape index: {}]
  %s1 = inlined_call_operand.vmem [shape: bf16[16,32], index: 1, kind: input, shape index: {}]
  %s2 = inlined_call_operand.vmem [shape: bf16[32,32], index: 2, kind: input, shape index: {}]
  %s3 = inlined_call_operand.vmem [shape: bf16[32,32], index: 3, kind: input, shape index: {}]
  %s4 = inlined_call_operand.vmem [shape: f32[1,32], index: 4, kind: input, shape index: {}]
  %s5 = inlined_call_operand.vmem [shape: bf16[32,4], index: 5, kind: input, shape index: {}]
  %s6 = inlined_call_operand.vmem [shape: bf16[32,4], index: 6, kind: input, shape index: {}]
  %s7 = inlined_call_operand.vmem [shape: f32[1,4], index: 7, kind: input, shape index: {}]
  %s8 = inlined_call_operand.vmem [shape: s32[16,1], index: 8, kind: input, shape index: {}]
  %s9 = inlined_call_operand.hbm [shape: f32[1,1], index: 9, kind: output, shape index: {}]
  %s10 = sld [smem:[#allocation0]]
  $region46: #{base_forward.1} parent=0
    _
  %s12 = ssub.s32 1, %s10
  %s13 = scalar_select 0, %s12, %s10
  $region1: #{base_forward.1} parent=0
    #allocation2 [shape = 'u8[512]{0}', space=vmem, size = 0x400, scoped, tag = 'output window, operand 0, single buffered']
    #allocation3 [shape = 's32[1]{0}', space=sflag, size = 0x4, scoped, tag = 'scoped memory for base_forward.1']
    %14 = vsyncpa [#allocation3], 0
    // Predicated region
    $region2: #{base_forward.1} parent=1 // pred_check
      _
    $region3: #{base_forward.1} parent=1 // pred_check_branch
      %16 = sbr.rel (0) target = $region5
    $region4: #{base_forward.1} parent=1 // pred_region
      _
    $region5: #{base_forward.1} parent=1 // pred_fallthru
      _
    // Predicated region
    $region6: #{base_forward.1} parent=1 // pred_check
      _
    $region7: #{base_forward.1} parent=1 // pred_check_branch
      %18 = sbr.rel (0) target = $region9
    $region8: #{base_forward.1} parent=1 // pred_region
      _
    $region9: #{base_forward.1} parent=1 // pred_fallthru
      _
    // Predicated region
    $region10: #{base_forward.1} parent=1 // pred_check
      _
    $region11: #{base_forward.1} parent=1 // pred_check_branch
      %20 = sbr.rel (0) target = $region13
    $region12: #{base_forward.1} parent=1 // pred_region
      _
    $region13: #{base_forward.1} parent=1 // pred_fallthru
      _
    // Predicated region
    $region14: #{base_forward.1} parent=1 // pred_check
      _
    $region15: #{base_forward.1} parent=1 // pred_check_branch
      %22 = sbr.rel (0) target = $region17
    $region16: #{base_forward.1} parent=1 // pred_region
      _
    $region17: #{base_forward.1} parent=1 // pred_fallthru
      _
    // Predicated region
    $region18: #{base_forward.1} parent=1 // pred_check
      _
    $region19: #{base_forward.1} parent=1 // pred_check_branch
      %24 = sbr.rel (0) target = $region21
    $region20: #{base_forward.1} parent=1 // pred_region
      _
    $region21: #{base_forward.1} parent=1 // pred_fallthru
      _
    // Predicated region
    $region22: #{base_forward.1} parent=1 // pred_check
      _
    $region23: #{base_forward.1} parent=1 // pred_check_branch
      %26 = sbr.rel (0) target = $region25
    $region24: #{base_forward.1} parent=1 // pred_region
      _
    $region25: #{base_forward.1} parent=1 // pred_fallthru
      _
    // Predicated region
    $region26: #{base_forward.1} parent=1 // pred_check
      _
    $region27: #{base_forward.1} parent=1 // pred_check_branch
      %28 = sbr.rel (0) target = $region29
    $region28: #{base_forward.1} parent=1 // pred_region
      _
    $region29: #{base_forward.1} parent=1 // pred_fallthru
      _
    // Predicated region
    $region30: #{base_forward.1} parent=1 // pred_check
      _
    $region31: #{base_forward.1} parent=1 // pred_check_branch
      %30 = sbr.rel (0) target = $region33
    $region32: #{base_forward.1} parent=1 // pred_region
      _
    $region33: #{base_forward.1} parent=1 // pred_fallthru
      _
    // Predicated region
    $region34: #{base_forward.1} parent=1 // pred_check
      _
    $region35: #{base_forward.1} parent=1 // pred_check_branch
      %32 = sbr.rel (0) target = $region37
    $region36: #{base_forward.1} parent=1 // pred_region
      _
    $region37: #{base_forward.1} parent=1 // pred_fallthru
      _
    %v34 = vld [vmem:[%s0] sm:$0xf]
    %v35 = vld [vmem:[%s0 + $0x4] sm:$0xf]
    %v36 = vld [vmem:[%s1] sm:$0xf]
    %v37 = vld [vmem:[%s1 + $0x4] sm:$0xf]
    %v38 = vld [vmem:[%s2] sm:$0xf]
    %v39 = vld [vmem:[%s2 + $0x4] sm:$0xf]
    %v40 = vld [vmem:[%s2 + $0x8] sm:$0xf]
    %v41 = vld [vmem:[%s2 + $0xc] sm:$0xf]
    %v42 = vld [vmem:[%s3] sm:$0xf]
    %v43 = vld [vmem:[%s3 + $0x4] sm:$0xf]
    %v44 = vld [vmem:[%s3 + $0x8] sm:$0xf]
    %v45 = vld [vmem:[%s3 + $0xc] sm:$0xf]
    %v46 = vld [vmem:[%s4] sm:$0x1]
    %v49 = vunpack.c.l.b16 %v34
    %v50 = vunpack.c.l.b16 %v35
    %v51 = vpack.c.b16 %v50, %v49
    %v54 = vunpack.c.l.b16 %v36
    %v55 = vunpack.c.l.b16 %v37
    %v56 = vpack.c.b16 %v55, %v54
    %vm58 = vcmask 130048
    %v60 = vsel %vm58, %v51, 0
    %62 = vmatprep.subr.bf16.mxu0 0
    %63 = vmatpush1.bf16.msra.mxu0 %v56
    %64 = vmatprep.subr.bf16.mxu0 0
    %65 = vmatpush1.bf16.msra.mxu0 0
    %66 = vmatprep.subr.bf16.mxu0 0
    %67 = vmatpush1.bf16.msra.mxu0 0
    %68 = vmatprep.subr.bf16.mxu0 0
    %69 = vmatpush1.bf16.msra.mxu0 0
    %70 = vmatprep.subr.bf16.mxu0 0
    %71 = vmatpush1.bf16.msra.mxu0 0
    %72 = vmatprep.subr.bf16.mxu0 0
    %73 = vmatpush1.bf16.msra.mxu0 0
    %74 = vmatprep.subr.bf16.mxu0 0
    %75 = vmatpush1.bf16.msra.mxu0 0
    %76 = vmatprep.subr.bf16.mxu0 0
    %77 = vmatpush1.bf16.msra.mxu0 0
    %78 = vmatprep.subr.bf16.mxu0 0
    %79 = vmatpush1.bf16.msra.mxu0 0
    %80 = vmatprep.subr.bf16.mxu0 0
    %81 = vmatpush1.bf16.msra.mxu0 0
    %82 = vmatprep.subr.bf16.mxu0 0
    %83 = vmatpush1.bf16.msra.mxu0 0
    %84 = vmatprep.subr.bf16.mxu0 0
    %85 = vmatpush1.bf16.msra.mxu0 0
    %86 = vmatprep.subr.bf16.mxu0 0
    %87 = vmatpush1.bf16.msra.mxu0 0
    %88 = vmatprep.subr.bf16.mxu0 0
    %89 = vmatpush1.bf16.msra.mxu0 0
    %90 = vmatprep.subr.bf16.mxu0 0
    %91 = vmatpush1.bf16.msra.mxu0 0
    %92 = vmatprep.subr.bf16.mxu0 0
    %93 = vmatpush1.bf16.msra.mxu0 0
    %94 = vmatprep.mubr.bf16.mxu0 0
    %95 = vmatmul.mubr.bf16.gmra.mrb[0].mxu0 %v60
    %v96 = vpop.f32.mrb[0].mxu0
    %v97 = vadd.f32 0.0, %v96
    %v98 = vpop.f32.mrb[0].mxu0
    %v99 = vpop.f32.mrb[0].mxu0
    %v100 = vadd.f32 0.0, %v99
    %v101 = vpop.f32.mrb[0].mxu0
    %102 = vdwg.mxu0
    %v103 = vpack.c.bf16 %v100, %v97
    %v108 = vunpack.c.l.b16 %v42
    %v109 = vunpack.c.l.b16 %v43
    %v110 = vunpack.c.l.b16 %v44
    %v111 = vunpack.c.l.b16 %v45
    %v112 = vpack.c.b16 %v109, %v108
    %v113 = vpack.c.b16 %v111, %v110
    %vm116 = vcmask 261120
    %v118 = vsel %vm116, %v56, 0
    %120 = vmatprep.subr.bf16.mxu0 0
    %121 = vmatpush1.bf16.msra.mxu0 %v112
    %122 = vmatprep.subr.bf16.mxu0 0
    %123 = vmatpush1.bf16.msra.mxu0 %v113
    %124 = vmatprep.subr.bf16.mxu0 0
    %125 = vmatpush1.bf16.msra.mxu0 0
    %126 = vmatprep.subr.bf16.mxu0 0
    %127 = vmatpush1.bf16.msra.mxu0 0
    %128 = vmatprep.subr.bf16.mxu0 0
    %129 = vmatpush1.bf16.msra.mxu0 0
    %130 = vmatprep.subr.bf16.mxu0 0
    %131 = vmatpush1.bf16.msra.mxu0 0
    %132 = vmatprep.subr.bf16.mxu0 0
    %133 = vmatpush1.bf16.msra.mxu0 0
    %134 = vmatprep.subr.bf16.mxu0 0
    %135 = vmatpush1.bf16.msra.mxu0 0
    %136 = vmatprep.subr.bf16.mxu0 0
    %137 = vmatpush1.bf16.msra.mxu0 0
    %138 = vmatprep.subr.bf16.mxu0 0
    %139 = vmatpush1.bf16.msra.mxu0 0
    %140 = vmatprep.subr.bf16.mxu0 0
    %141 = vmatpush1.bf16.msra.mxu0 0
    %142 = vmatprep.subr.bf16.mxu0 0
    %143 = vmatpush1.bf16.msra.mxu0 0
    %144 = vmatprep.subr.bf16.mxu0 0
    %145 = vmatpush1.bf16.msra.mxu0 0
    %146 = vmatprep.subr.bf16.mxu0 0
    %147 = vmatpush1.bf16.msra.mxu0 0
    %148 = vmatprep.subr.bf16.mxu0 0
    %149 = vmatpush1.bf16.msra.mxu0 0
    %150 = vmatprep.subr.bf16.mxu0 0
    %151 = vmatpush1.bf16.msra.mxu0 0
    %152 = vmatprep.mubr.bf16.mxu0 0
    %153 = vmatmul.mubr.bf16.gmra.mrb[0].mxu0 %v118
    %v154 = vpop.f32.mrb[0].mxu0
    %v155 = vadd.f32 0.0, %v154
    %v156 = vpop.f32.mrb[0].mxu0
    %v157 = vpop.f32.mrb[0].mxu0
    %v158 = vadd.f32 0.0, %v157
    %v159 = vpop.f32.mrb[0].mxu0
    %160 = vdwg.mxu0
    %v165 = vunpack.c.l.b16 %v38
    %v166 = vunpack.c.l.b16 %v39
    %v167 = vunpack.c.l.b16 %v40
    %v168 = vunpack.c.l.b16 %v41
    %v169 = vpack.c.b16 %v166, %v165
    %v170 = vpack.c.b16 %v168, %v167
    %v174 = vsel %vm116, %v103, 0
    %176 = vmatprep.subr.bf16.mxu0 0
    %177 = vmatpush1.bf16.msra.mxu0 %v169
    %178 = vmatprep.subr.bf16.mxu0 0
    %179 = vmatpush1.bf16.msra.mxu0 %v170
    %180 = vmatprep.subr.bf16.mxu0 0
    %181 = vmatpush1.bf16.msra.mxu0 0
    %182 = vmatprep.subr.bf16.mxu0 0
    %183 = vmatpush1.bf16.msra.mxu0 0
    %184 = vmatprep.subr.bf16.mxu0 0
    %185 = vmatpush1.bf16.msra.mxu0 0
    %186 = vmatprep.subr.bf16.mxu0 0
    %187 = vmatpush1.bf16.msra.mxu0 0
    %188 = vmatprep.subr.bf16.mxu0 0
    %189 = vmatpush1.bf16.msra.mxu0 0
    %190 = vmatprep.subr.bf16.mxu0 0
    %191 = vmatpush1.bf16.msra.mxu0 0
    %192 = vmatprep.subr.bf16.mxu0 0
    %193 = vmatpush1.bf16.msra.mxu0 0
    %194 = vmatprep.subr.bf16.mxu0 0
    %195 = vmatpush1.bf16.msra.mxu0 0
    %196 = vmatprep.subr.bf16.mxu0 0
    %197 = vmatpush1.bf16.msra.mxu0 0
    %198 = vmatprep.subr.bf16.mxu0 0
    %199 = vmatpush1.bf16.msra.mxu0 0
    %200 = vmatprep.subr.bf16.mxu0 0
    %201 = vmatpush1.bf16.msra.mxu0 0
    %202 = vmatprep.subr.bf16.mxu0 0
    %203 = vmatpush1.bf16.msra.mxu0 0
    %204 = vmatprep.subr.bf16.mxu0 0
    %205 = vmatpush1.bf16.msra.mxu0 0
    %206 = vmatprep.subr.bf16.mxu0 0
    %207 = vmatpush1.bf16.msra.mxu0 0
    %208 = vmatprep.mubr.bf16.mxu0 0
    %209 = vmatmul.mubr.bf16.gmra.mrb[0].mxu0 %v174
    %v210 = vpop.f32.mrb[0].mxu0
    %v211 = vadd.f32 %v155, %v210
    %v212 = vpop.f32.mrb[0].mxu0
    %v213 = vpop.f32.mrb[0].mxu0
    %v214 = vadd.f32 %v158, %v213
    %v215 = vpop.f32.mrb[0].mxu0
    %216 = vdwg.mxu0
    %v218 = vlaneseq
    %v219 = vshrl.u32 %v218, 7
    %v220 = vsub.s32 0, %v219
    %v221 = vrot.slane %v46, %v220
    %v223 = vadd.f32 %v211, %v221
    %v224 = vadd.f32 %v214, %v221
    %v225 = vmax.f32 %v223, 0.0
    %v226 = vmax.f32 %v224, 0.0
    %v227 = vpack.c.bf16 %v226, %v225
    %v228 = vld [vmem:[%s5] sm:$0xf]
    %v229 = vld [vmem:[%s5 + $0x4] sm:$0xf]
    %v230 = vld [vmem:[%s5 + $0x8] sm:$0xf]
    %v231 = vld [vmem:[%s5 + $0xc] sm:$0xf]
    %v232 = vld [vmem:[%s6] sm:$0xf]
    %v233 = vld [vmem:[%s6 + $0x4] sm:$0xf]
    %v234 = vld [vmem:[%s6 + $0x8] sm:$0xf]
    %v235 = vld [vmem:[%s6 + $0xc] sm:$0xf]
    %v236 = vld [vmem:[%s7] sm:$0x1]
    %237 = vmatprep.subr.bf16.mxu0 0
    %238 = vmatpush1.bf16.msra.mxu0 %v227
    %239 = vmatprep.subr.bf16.mxu0 0
    %240 = vmatpush1.bf16.msra.mxu0 0
    %241 = vmatprep.subr.bf16.mxu0 0
    %242 = vmatpush1.bf16.msra.mxu0 0
    %243 = vmatprep.subr.bf16.mxu0 0
    %244 = vmatpush1.bf16.msra.mxu0 0
    %245 = vmatprep.subr.bf16.mxu0 0
    %246 = vmatpush1.bf16.msra.mxu0 0
    %247 = vmatprep.subr.bf16.mxu0 0
    %248 = vmatpush1.bf16.msra.mxu0 0
    %249 = vmatprep.subr.bf16.mxu0 0
    %250 = vmatpush1.bf16.msra.mxu0 0
    %251 = vmatprep.subr.bf16.mxu0 0
    %252 = vmatpush1.bf16.msra.mxu0 0
    %253 = vmatprep.subr.bf16.mxu0 0
    %254 = vmatpush1.bf16.msra.mxu0 0
    %255 = vmatprep.subr.bf16.mxu0 0
    %256 = vmatpush1.bf16.msra.mxu0 0
    %257 = vmatprep.subr.bf16.mxu0 0
    %258 = vmatpush1.bf16.msra.mxu0 0
    %259 = vmatprep.subr.bf16.mxu0 0
    %260 = vmatpush1.bf16.msra.mxu0 0
    %261 = vmatprep.subr.bf16.mxu0 0
    %262 = vmatpush1.bf16.msra.mxu0 0
    %263 = vmatprep.subr.bf16.mxu0 0
    %264 = vmatpush1.bf16.msra.mxu0 0
    %265 = vmatprep.subr.bf16.mxu0 0
    %266 = vmatpush1.bf16.msra.mxu0 0
    %267 = vmatprep.subr.bf16.mxu0 0
    %268 = vmatpush1.bf16.msra.mxu0 0
    %269 = vmatprep.mubr.bf16.mxu0 0
    %270 = vmatmul.mubr.bf16.gmra.mrb[0].mxu0 %v60
    %v271 = vpop.f32.mrb[0].mxu0
    %v272 = vadd.f32 0.0, %v271
    %v273 = vpop.f32.mrb[0].mxu0
    %v274 = vpop.f32.mrb[0].mxu0
    %v275 = vadd.f32 0.0, %v274
    %v276 = vpop.f32.mrb[0].mxu0
    %277 = vdwg.mxu0
    %v278 = vpack.c.bf16 %v275, %v272
    %v283 = vunpack.c.l.b16 %v232
    %v284 = vunpack.c.l.b16 %v233
    %v285 = vunpack.c.l.b16 %v234
    %v286 = vunpack.c.l.b16 %v235
    %v287 = vpack.c.b16 %v284, %v283
    %v288 = vpack.c.b16 %v286, %v285
    %v292 = vsel %vm116, %v227, 0
    %294 = vmatprep.subr.bf16.mxu0 0
    %295 = vmatpush1.bf16.msra.mxu0 %v287
    %296 = vmatprep.subr.bf16.mxu0 0
    %297 = vmatpush1.bf16.msra.mxu0 %v288
    %298 = vmatprep.subr.bf16.mxu0 0
    %299 = vmatpush1.bf16.msra.mxu0 0
    %300 = vmatprep.subr.bf16.mxu0 0
    %301 = vmatpush1.bf16.msra.mxu0 0
    %302 = vmatprep.subr.bf16.mxu0 0
    %303 = vmatpush1.bf16.msra.mxu0 0
    %304 = vmatprep.subr.bf16.mxu0 0
    %305 = vmatpush1.bf16.msra.mxu0 0
    %306 = vmatprep.subr.bf16.mxu0 0
    %307 = vmatpush1.bf16.msra.mxu0 0
    %308 = vmatprep.subr.bf16.mxu0 0
    %309 = vmatpush1.bf16.msra.mxu0 0
    %310 = vmatprep.subr.bf16.mxu0 0
    %311 = vmatpush1.bf16.msra.mxu0 0
    %312 = vmatprep.subr.bf16.mxu0 0
    %313 = vmatpush1.bf16.msra.mxu0 0
    %314 = vmatprep.subr.bf16.mxu0 0
    %315 = vmatpush1.bf16.msra.mxu0 0
    %316 = vmatprep.subr.bf16.mxu0 0
    %317 = vmatpush1.bf16.msra.mxu0 0
    %318 = vmatprep.subr.bf16.mxu0 0
    %319 = vmatpush1.bf16.msra.mxu0 0
    %320 = vmatprep.subr.bf16.mxu0 0
    %321 = vmatpush1.bf16.msra.mxu0 0
    %322 = vmatprep.subr.bf16.mxu0 0
    %323 = vmatpush1.bf16.msra.mxu0 0
    %324 = vmatprep.subr.bf16.mxu0 0
    %325 = vmatpush1.bf16.msra.mxu0 0
    %326 = vmatprep.mubr.bf16.mxu0 0
    %327 = vmatmul.mubr.bf16.gmra.mrb[0].mxu0 %v292
    %v328 = vpop.f32.mrb[0].mxu0
    %v329 = vadd.f32 0.0, %v328
    %v330 = vpop.f32.mrb[0].mxu0
    %v331 = vpop.f32.mrb[0].mxu0
    %v332 = vadd.f32 0.0, %v331
    %v333 = vpop.f32.mrb[0].mxu0
    %334 = vdwg.mxu0
    %v339 = vunpack.c.l.b16 %v228
    %v340 = vunpack.c.l.b16 %v229
    %v341 = vunpack.c.l.b16 %v230
    %v342 = vunpack.c.l.b16 %v231
    %v343 = vpack.c.b16 %v340, %v339
    %v344 = vpack.c.b16 %v342, %v341
    %v348 = vsel %vm116, %v278, 0
    %350 = vmatprep.subr.bf16.mxu0 0
    %351 = vmatpush1.bf16.msra.mxu0 %v343
    %352 = vmatprep.subr.bf16.mxu0 0
    %353 = vmatpush1.bf16.msra.mxu0 %v344
    %354 = vmatprep.subr.bf16.mxu0 0
    %355 = vmatpush1.bf16.msra.mxu0 0
    %356 = vmatprep.subr.bf16.mxu0 0
    %357 = vmatpush1.bf16.msra.mxu0 0
    %358 = vmatprep.subr.bf16.mxu0 0
    %359 = vmatpush1.bf16.msra.mxu0 0
    %360 = vmatprep.subr.bf16.mxu0 0
    %361 = vmatpush1.bf16.msra.mxu0 0
    %362 = vmatprep.subr.bf16.mxu0 0
    %363 = vmatpush1.bf16.msra.mxu0 0
    %364 = vmatprep.subr.bf16.mxu0 0
    %365 = vmatpush1.bf16.msra.mxu0 0
    %366 = vmatprep.subr.bf16.mxu0 0
    %367 = vmatpush1.bf16.msra.mxu0 0
    %368 = vmatprep.subr.bf16.mxu0 0
    %369 = vmatpush1.bf16.msra.mxu0 0
    %370 = vmatprep.subr.bf16.mxu0 0
    %371 = vmatpush1.bf16.msra.mxu0 0
    %372 = vmatprep.subr.bf16.mxu0 0
    %373 = vmatpush1.bf16.msra.mxu0 0
    %374 = vmatprep.subr.bf16.mxu0 0
    %375 = vmatpush1.bf16.msra.mxu0 0
    %376 = vmatprep.subr.bf16.mxu0 0
    %377 = vmatpush1.bf16.msra.mxu0 0
    %378 = vmatprep.subr.bf16.mxu0 0
    %379 = vmatpush1.bf16.msra.mxu0 0
    %380 = vmatprep.subr.bf16.mxu0 0
    %381 = vmatpush1.bf16.msra.mxu0 0
    %382 = vmatprep.mubr.bf16.mxu0 0
    %383 = vmatmul.mubr.bf16.gmra.mrb[0].mxu0 %v348
    %v384 = vpop.f32.mrb[0].mxu0
    %v385 = vadd.f32 %v329, %v384
    %v386 = vpop.f32.mrb[0].mxu0
    %v387 = vpop.f32.mrb[0].mxu0
    %v388 = vadd.f32 %v332, %v387
    %v389 = vpop.f32.mrb[0].mxu0
    %390 = vdwg.mxu0
    %v392 = vlaneseq
    %v393 = vshrl.u32 %v392, 7
    %v394 = vsub.s32 0, %v393
    %v395 = vrot.slane %v236, %v394
    %v397 = vadd.f32 %v385, %v395
    %v398 = vadd.f32 %v388, %v395
    %vm399 = vcmask 31744
    %v400 = vsel %vm399, %v397, -inf
    %401 = vmax.xlane.f32.xlu0 %v400
    %v402 = vpop.xlane.xlu0 %401
    %v403 = vsel %vm399, %v398, -inf
    %404 = vmax.xlane.f32.xlu0 %v403
    %v405 = vpop.xlane.xlu0 %404
    %v406 = vsub.f32 %v397, %v402
    %v407 = vsub.f32 %v398, %v405
    %v408 = vmul.f32 %v406, 1.442695
    %v409 = vpow.pop %v408
    %v410 = vmul.f32 %v407, 1.442695
    %v411 = vpow.pop %v410
    %v412 = vsel %vm399, %v409, 0.0
    %413 = vadd.xlane.f32.xlu0 %v412
    %v414 = vpop.xlane.xlu0 %413
    %v415 = vsel %vm399, %v411, 0.0
    %416 = vadd.xlane.f32.xlu0 %v415
    %v417 = vpop.xlane.xlu0 %416
    %v418 = vlog2.pop %v414
    %v419 = vmul.f32 %v418, 0.6931472
    %v420 = vlog2.pop %v417
    %v421 = vmul.f32 %v420, 0.6931472
    %v422 = vsub.f32 %v406, %v419
    %v423 = vsub.f32 %v407, %v421
    %v424 = vld [vmem:[%s8] sm:$0xff]
    %v425 = vld [vmem:[%s8 + $0x8] sm:$0xff]
    %v426 = vlaneseq
    %v427 = vand.u32 %v426, 127
    %428 = vset.pattern.permute.xlu0 0
    %429 = vperm.xlu0 %428, %v424
    %v430 = vpop.permute.xlu0 %429
    %431 = vset.pattern.permute.xlu0 0
    %432 = vperm.xlu0 %431, %v425
    %v433 = vpop.permute.xlu0 %432
    %vm434 = vcmp.eq.s32.totalorder %v427, %v430
    %vm435 = vcmp.eq.s32.totalorder %v427, %v433
    %v436 = vsel %vm434, %v422, 0.0
    %v437 = vsel %vm435, %v423, 0.0
    %v438 = vsel %vm399, %v436, 0.0
    %439 = vadd.xlane.f32.xlu0 %v438
    %v440 = vpop.xlane.xlu0 %439
    %v441 = vsel %vm399, %v437, 0.0
    %442 = vadd.xlane.f32.xlu0 %v441
    %v443 = vpop.xlane.xlu0 %442
    %v444 = vadd.f32 %v440, %v443
    %v445 = vrot.slane %v444, 4
    %v446 = vadd.f32 %v444, %v445
    %v447 = vrot.slane %v446, 2
    %v448 = vadd.f32 %v446, %v447
    %v449 = vrot.slane %v448, 1
    %v450 = vadd.f32 %v448, %v449
    %v451 = vsub.f32 0.0, %v450
    %v452 = vmul.f32 %v451, 0.0625
    %vm453 = vcmask 0
    %454 = vst.msk [vmem:[#allocation2] sm:$0x1] %vm453, %v452
    // Predicated region
    $region38: #{base_forward.1} parent=1 // pred_check
      _
    $region39: #{base_forward.1} parent=1 // pred_check_branch
      %456 = sbr.rel (0) target = $region41
    $region40: #{base_forward.1} parent=1 // pred_region
      %s458 = ssub.s32 16, 16
      %459 = vsyncadd [#allocation3], %s458
      %s461 = sshll.u32 [#allocation2], 4
      %s462 = int_to_ptr.vmem [resolvable:$true] %s461
      %464 = dma.vmem_to_hbm [thread:$0]  %s462, 16, %s9, [#allocation3]
    $region41: #{base_forward.1} parent=1 // pred_fallthru
      _
    // Predicated region
    $region42: #{base_forward.1} parent=1 // pred_check
      _
    $region43: #{base_forward.1} parent=1 // pred_check_branch
      %466 = sbr.rel (0) target = $region45
    $region44: #{base_forward.1} parent=1 // pred_region
      %467 = dma.done [#allocation3], 16
    $region45: #{base_forward.1} parent=1 // pred_fallthru
      _
    %468 = vsyncpa [#allocation3], 1

</llo_original>
